<compile_context>
chip_gen: v7x
topology: tpu7x:2x2x1
jax: 0.10.0
libtpu: 0.0.40
codegen_flags: <defaults>
</compile_context>

<pallas_src>
import functools

import jax
import jax.numpy as jnp
from jax.experimental import pallas as pl
from jax.experimental.pallas import tpu as pltpu


_ACTIVATIONS = {
    "silu": jax.nn.silu,
    "swish": jax.nn.silu,
    "sigmoid": jax.nn.sigmoid,
    "gelu": jax.nn.gelu,
    "relu": jax.nn.relu,
    "tanh": jnp.tanh,
    "identity": lambda v: v,
}

# Single-buffered budget for the (a, b, out) blocks of one grid step.
_VMEM_BLOCK_BUDGET_BYTES = 6 * 1024 * 1024
# Raised scoped-VMEM limit: above v5e/v6e defaults, well below v7x physical.
_VMEM_LIMIT_BYTES = 40 * 1024 * 1024


def _glu_split_kernel(a_ref, b_ref, o_ref, *, act):
    # Halves arrive as separate lane-dense blocks; pure VPU/EUP work in f32.
    a = a_ref[...].astype(jnp.float32)
    b = b_ref[...].astype(jnp.float32)
    o_ref[...] = (a * act(b)).astype(o_ref.dtype)


def _glu_fused_kernel(x_ref, o_ref, *, act, h):
    # Fallback for H not a multiple of 128: split inside the kernel.
    x = x_ref[...].astype(jnp.float32)
    o_ref[...] = (x[:, :h] * act(x[:, h:])).astype(o_ref.dtype)


def _round_up(n: int, m: int) -> int:
    return ((n + m - 1) // m) * m


def _sublane_quantum(itemsize: int) -> int:
    # f32 -> 8, bf16/f16 -> 16, int8/fp8 -> 32 rows per packed vreg sublane tile.
    return max(8, 32 // max(itemsize, 1))


def _pick_row_tile(rows: int, bytes_per_row_all_blocks: int, quantum: int) -> int:
    """Largest quantum-multiple row tile whose live blocks fit the VMEM budget."""
    tm = _VMEM_BLOCK_BUDGET_BYTES // max(bytes_per_row_all_blocks, 1)
    tm = (tm // quantum) * quantum
    tm = max(quantum, min(tm, 1024))
    tm = min(tm, _round_up(rows, quantum))
    return tm


def glu_activation(x: jax.Array, *, activation: str = "silu") -> jax.Array:
    """GLU: split last dim in two, return x0 * base_activation(x1)."""
    act = _ACTIVATIONS[activation]
    orig_shape = x.shape
    two_h = orig_shape[-1]
    assert two_h % 2 == 0, "last dim must be even for GLU"
    h = two_h // 2

    rows = 1
    for d in orig_shape[:-1]:
        rows *= d
    x2d = x.reshape(rows, two_h)
    itemsize = jnp.dtype(x.dtype).itemsize
    quantum = _sublane_quantum(itemsize)

    if h % 128 == 0:
        # ---- aligned / performance path: two half-BlockSpecs + 2-D tiling ----
        tn = next(t for t in (2048, 1024, 512, 256, 128) if h % t == 0)
        n_lane = h // tn
        tm = _pick_row_tile(rows, 3 * tn * itemsize, quantum)  # a + b + out blocks
        grid = (pl.cdiv(rows, tm), n_lane)

        out2d = pl.pallas_call(
            functools.partial(_glu_split_kernel, act=act),
            out_shape=jax.ShapeDtypeStruct((rows, h), x.dtype),
            grid_spec=pltpu.PrefetchScalarGridSpec(
                num_scalar_prefetch=0,
                grid=grid,
                in_specs=[
                    pl.BlockSpec((tm, tn), lambda i, j: (i, j)),           # x0 half
                    pl.BlockSpec((tm, tn), lambda i, j: (i, j + n_lane)),  # x1 half
                ],
                out_specs=pl.BlockSpec((tm, tn), lambda i, j: (i, j)),
            ),
            compiler_params=pltpu.CompilerParams(
                dimension_semantics=("parallel", "parallel"),
                vmem_limit_bytes=_VMEM_LIMIT_BYTES,
            ),
        )(x2d, x2d)
    else:
        # ---- small / unaligned H fallback: full-width block, split in-kernel ----
        tm = _pick_row_tile(rows, 3 * h * itemsize, quantum)  # (2H in + H out)/row
        grid = (pl.cdiv(rows, tm),)

        out2d = pl.pallas_call(
            functools.partial(_glu_fused_kernel, act=act, h=h),
            out_shape=jax.ShapeDtypeStruct((rows, h), x.dtype),
            grid_spec=pltpu.PrefetchScalarGridSpec(
                num_scalar_prefetch=0,
                grid=grid,
                in_specs=[pl.BlockSpec((tm, two_h), lambda i: (i, 0))],
                out_specs=pl.BlockSpec((tm, h), lambda i: (i, 0)),
            ),
            compiler_params=pltpu.CompilerParams(
                dimension_semantics=("parallel",),
                vmem_limit_bytes=_VMEM_LIMIT_BYTES,
            ),
        )(x2d)

    return out2d.reshape(*orig_shape[:-1], h)


def _glu_reference(x: jax.Array, activation: str = "silu") -> jax.Array:
    act = _ACTIVATIONS[activation]
    h = x.shape[-1] // 2
    a, b = x[..., :h], x[..., h:]
    return a * act(b)


if __name__ == "__main__":
    key = jax.random.PRNGKey(0)
    k1, k2, k3 = jax.random.split(key, 3)

    # Test 1: small shape (fallback path, H=32): batch=2, seq=8, hidden=2*H=64.
    x1 = jax.random.normal(k1, (2, 8, 64), dtype=jnp.float32)
    o1 = glu_activation(x1)
    jax.block_until_ready(o1)
    assert o1.shape == (2, 8, 32), o1.shape
    assert jnp.allclose(o1, _glu_reference(x1), atol=1e-5, rtol=1e-5), "mismatch (test1)"

    # Test 2: aligned path (H=256) with a row count that exercises the masked tail.
    x2 = jax.random.normal(k2, (3, 41, 512), dtype=jnp.float32)
    o2 = glu_activation(x2)
    jax.block_until_ready(o2)
    assert o2.shape == (3, 41, 256), o2.shape
    assert jnp.allclose(o2, _glu_reference(x2), atol=1e-5, rtol=1e-5), "mismatch (test2)"

    # Test 3: bf16 I/O on the aligned path (H=128).
    x3 = jax.random.normal(k3, (4, 16, 256), dtype=jnp.bfloat16)
    o3 = glu_activation(x3)
    jax.block_until_ready(o3)
    ref3 = _glu_reference(x3.astype(jnp.float32))
    assert o3.shape == (4, 16, 128), o3.shape
    assert jnp.allclose(o3.astype(jnp.float32), ref3, atol=5e-2, rtol=5e-2), "mismatch (test3)"

    print("KERNEL_OK")
</pallas_src>

<mosaic_0001>
module attributes {stable_mosaic.version = 11 : i64} {
  func.func @_glu_fused_kernel(%arg0: i32, %arg1: memref<16x64xf32, #tpu.memory_space<vmem>>, %arg2: memref<16x32xf32, #tpu.memory_space<vmem>>) attributes {dimension_semantics = [#tpu.dimension_semantics<parallel>], iteration_bounds = array<i64: 1>, scalar_prefetch = 0 : i64, scratch_operands = 0 : i64, tpu.core_type = #tpu.core_type<tc>, window_params = [{transform_indices = @transform_0, window_bounds = array<i64: 16, 64>}, {transform_indices = @transform_1, window_bounds = array<i64: 16, 32>}]} {
    %c0 = arith.constant 0 : index
    %c0_0 = arith.constant 0 : index
    %0 = vector.load %arg1[%c0, %c0_0] : memref<16x64xf32, #tpu.memory_space<vmem>>, vector<16x64xf32>
    %1 = vector.extract_strided_slice %0 {offsets = [0, 0], sizes = [16, 32], strides = [1, 1]} : vector<16x64xf32> to vector<16x32xf32>
    %2 = vector.extract_strided_slice %0 {offsets = [0, 32], sizes = [16, 32], strides = [1, 1]} : vector<16x64xf32> to vector<16x32xf32>
    %3 = arith.negf %2 : vector<16x32xf32>
    %4 = math.exp %3 : vector<16x32xf32>
    %cst = arith.constant 1.000000e+00 : f32
    %5 = vector.broadcast %cst : f32 to vector<16x32xf32>
    %6 = arith.addf %5, %4 : vector<16x32xf32>
    %7 = arith.divf %5, %6 : vector<16x32xf32>
    %8 = arith.mulf %2, %7 : vector<16x32xf32>
    %9 = arith.mulf %1, %8 : vector<16x32xf32>
    %c0_1 = arith.constant 0 : index
    %c0_2 = arith.constant 0 : index
    %10 = vector.load %arg2[%c0_1, %c0_2] : memref<16x32xf32, #tpu.memory_space<vmem>>, vector<16x32xf32>
    tpu.vector_store %arg2[%c0_1, %c0_2], %9 {strides = array<i32>} : memref<16x32xf32, #tpu.memory_space<vmem>>, vector<16x32xf32>,
    return
  }
  func.func @transform_0(%arg0: i32) -> (i32, i32) {
    %c0_i32 = arith.constant 0 : i32
    %c0_i32_0 = arith.constant 0 : i32
    return %arg0, %c0_i32 : i32, i32
  }
  func.func @transform_1(%arg0: i32) -> (i32, i32) {
    %c0_i32 = arith.constant 0 : i32
    %c0_i32_0 = arith.constant 0 : i32
    return %arg0, %c0_i32 : i32, i32
  }
}

</mosaic_0001>

<llo_original>
// kernel: tpu_custom_call.1
$region0: #{tpu_custom_call.1}
  #allocation0 [shape = 'u32[]', space=smem, size = 0x4, offset = 0x4, fixed_abs, tag = 'smem constant byte address 0x4 - core index']
  #allocation1 [shape = 'u32[144,128]{1,0:T(1,128)}', space=vmem, size = 0x12000, scoped, tag = 'internal scratch']
  %s0 = inlined_call_operand.hbm [shape: f32[16,64], index: 0, kind: input, shape index: {}]
  %s1 = inlined_call_operand.hbm [shape: f32[16,32], index: 1, kind: output, shape index: {}]
  %s2 = sld [smem:[#allocation0]]
  $region18: #{tpu_custom_call.1} parent=0
    _
  %s4 = ssub.s32 1, %s2
  %s5 = scalar_select 0, %s4, %s2
  $region1: #{tpu_custom_call.1} parent=0
    #allocation2 [shape = 'u8[8192]{0}', space=vmem, size = 0x2000, scoped, tag = 'input window, operand 0, single buffered']
    #allocation3 [shape = 's32[1]{0}', space=sflag, size = 0x4, scoped, tag = 'scoped memory for tpu_custom_call.1']
    #allocation4 [shape = 's32[1]{0}', space=sflag, size = 0x4, scoped, tag = 'scoped memory for tpu_custom_call.1']
    #allocation5 [shape = 'u8[8192]{0}', space=vmem, size = 0x2000, scoped, tag = 'output window, operand 0, single buffered']
    %6 = vsyncpa [#allocation3], 0
    %7 = vsyncpa [#allocation4], 0
    // Predicated region
    $region2: #{tpu_custom_call.1} parent=1 // pred_check
      _
    $region3: #{tpu_custom_call.1} parent=1 // pred_check_branch
      %9 = sbr.rel (0) target = $region5
    $region4: #{tpu_custom_call.1} parent=1 // pred_region
      %s11 = ssub.s32 256, 256
      %12 = vsyncadd [#allocation3], %s11
      %s13 = sshll.u32 [#allocation2], 4
      %s14 = int_to_ptr.vmem [resolvable:$true] %s13
      %19 = dma.hbm_to_vmem [thread:$0]  %s0, 256, %s14, [#allocation3], 128, 128, 8
    $region5: #{tpu_custom_call.1} parent=1 // pred_fallthru
      _
    // Predicated region
    $region6: #{tpu_custom_call.1} parent=1 // pred_check
      _
    $region7: #{tpu_custom_call.1} parent=1 // pred_check_branch
      %21 = sbr.rel (0) target = $region9
    $region8: #{tpu_custom_call.1} parent=1 // pred_region
      %22 = dma.done [#allocation3], 256
    $region9: #{tpu_custom_call.1} parent=1 // pred_fallthru
      _
    %v23 = vld [vmem:[#allocation2] sm:$0xff]
    %v24 = vld [vmem:[#allocation2 + $0x8] sm:$0xff]
    %v25 = vxor.u32 %v23, 2147483648
    %v26 = vxor.u32 %v24, 2147483648
    %v27 = vmul.f32 %v25, 1.442695
    %v28 = vpow.pop %v27
    %v29 = vmul.f32 %v26, 1.442695
    %v30 = vpow.pop %v29
    %v31 = vadd.f32 %v28, 1.0
    %v32 = vadd.f32 %v30, 1.0
    %v33 = vrcp.pop %v31
    %v34 = vmul.f32 1.0, %v33
    %v35 = vrcp.pop %v32
    %v36 = vmul.f32 1.0, %v35
    %v37 = vmul.f32 %v23, %v34
    %v38 = vmul.f32 %v24, %v36
    %41 = vrot.lane.b32.xlu0 %v37, 96
    %v42 = vpop.permute.xlu0 %41
    %43 = vrot.lane.b32.xlu0 %v38, 96
    %v44 = vpop.permute.xlu0 %43
    %v47 = vmul.f32 %v23, %v42
    %v48 = vmul.f32 %v24, %v44
    %vm49 = vcmask 261120
    %50 = vst.msk [vmem:[#allocation5] sm:$0xff] %vm49, %v47
    %51 = vst.msk [vmem:[#allocation5 + $0x8] sm:$0xff] %vm49, %v48
    // Predicated region
    $region10: #{tpu_custom_call.1} parent=1 // pred_check
      _
    $region11: #{tpu_custom_call.1} parent=1 // pred_check_branch
      %53 = sbr.rel (0) target = $region13
    $region12: #{tpu_custom_call.1} parent=1 // pred_region
      %s55 = ssub.s32 256, 256
      %56 = vsyncadd [#allocation4], %s55
      %s57 = sshll.u32 [#allocation5], 4
      %s58 = int_to_ptr.vmem [resolvable:$true] %s57
      %63 = dma.vmem_to_hbm [thread:$0]  %s58, 256, %s1, [#allocation4], 128, 128, 8
    $region13: #{tpu_custom_call.1} parent=1 // pred_fallthru
      _
    // Predicated region
    $region14: #{tpu_custom_call.1} parent=1 // pred_check
      _
    $region15: #{tpu_custom_call.1} parent=1 // pred_check_branch
      %65 = sbr.rel (0) target = $region17
    $region16: #{tpu_custom_call.1} parent=1 // pred_region
      %66 = dma.done [#allocation4], 256
    $region17: #{tpu_custom_call.1} parent=1 // pred_fallthru
      _
    %67 = vsyncpa [#allocation3], 1
    %68 = vsyncpa [#allocation4], 1

</llo_original>
